<compile_context>
chip_gen: v7x
topology: tpu7x:2x2x1
jax: 0.10.0
libtpu: 0.0.40
codegen_flags: <defaults>
</compile_context>

<pallas_src>
import functools

import jax
import jax.numpy as jnp
from jax import lax
from jax.experimental import pallas as pl
from jax.experimental.pallas import tpu as pltpu

ALPHA = 0.25
GAMMA = 2.0
NUM_CLASSES = 2
LANES = 128


def _focal_loss_kernel(x_ref, lab_ref, out_ref, *, alpha, gamma, n_valid,
                       full_blocks, has_tail):
    i = pl.program_id(0)

    x = x_ref[...].astype(jnp.float32)          # (R, 128) interleaved logits
    label = lab_ref[...].astype(jnp.float32)    # (R, 128) matching labels
    rows, lanes = x.shape

    # Partner logit of each lane (lane l <-> l ^ 1) via a permutation matmul
    # on the otherwise-idle MXU: x_other[:, j] = x[:, j ^ 1].
    ii = lax.broadcasted_iota(jnp.int32, (lanes, lanes), 0)
    jj = lax.broadcasted_iota(jnp.int32, (lanes, lanes), 1)
    perm = ((ii ^ 1) == jj).astype(jnp.float32)
    x_other = jnp.dot(x, perm, preferred_element_type=jnp.float32)

    # 2-class softmax: p(this lane's class) = sigmoid(x - x_other).
    d = x - x_other
    probs = 1.0 / (1.0 + jnp.exp(-d))

    # Focal modulating coefficient; gamma == 2 avoids the EUP pow (exp+log).
    ad = jnp.abs(label - probs)
    if gamma == 2.0:
        coeff = -(ad * ad)
    else:
        coeff = -jnp.power(ad, gamma)

    # Stable log(sigmoid(x)) / log(1 - sigmoid(x)); algebraically equal to the
    # torch.where(logits >= 0, softplus(...), ...) formulation.
    sp = jnp.log1p(jnp.exp(-jnp.abs(x)))
    log_probs = jnp.minimum(x, 0.0) - sp          # log p
    log_1_probs = jnp.minimum(-x, 0.0) - sp       # log (1 - p)

    loss = (label * alpha * log_probs
            + (1.0 - label) * (1.0 - alpha) * log_1_probs) * coeff

    def _partial(vals):
        # Sublane-only reduction to (8, 128): pure vreg adds, no lane reduce.
        # The cross-lane reduce of the tiny partials array happens once,
        # outside the kernel.
        return vals.reshape(rows // 8, 8, lanes).sum(axis=0)

    if not has_tail:
        out_ref[...] = _partial(loss)
    else:
        @pl.when(i < full_blocks)
        def _():
            out_ref[...] = _partial(loss)

        @pl.when(i >= full_blocks)
        def _():
            # Tail block(s): discard padded / out-of-range elements with a
            # select applied AFTER the loss so garbage (NaN/Inf) is dropped.
            r_idx = lax.broadcasted_iota(jnp.int32, (rows, lanes), 0)
            l_idx = lax.broadcasted_iota(jnp.int32, (rows, lanes), 1)
            flat = (i * rows + r_idx) * lanes + l_idx
            out_ref[...] = _partial(jnp.where(flat < n_valid, loss, 0.0))


def focal_loss(logits, target, *, alpha=ALPHA, gamma=GAMMA, reduction="mean",
               tile_rows=1024):
    """Pallas TPU FocalLoss.

    logits: (N, 2) float.  target: (N,) / (N, 1) int labels, or (N, 2) soft
    labels (both torch branches supported).
    """
    logits = jnp.asarray(logits)
    if logits.ndim != 2 or logits.shape[1] != NUM_CLASSES:
        raise ValueError("logits must have shape (N, 2)")
    n = logits.shape[0]
    n_valid = n * NUM_CLASSES

    # Build labels with the same (N, 2) layout as the logits.
    target = jnp.asarray(target)
    if target.ndim == 1 or (target.ndim == 2 and target.shape[-1] == 1):
        tgt = target.reshape(n).astype(jnp.int32)
        label = tgt[:, None] == jnp.arange(NUM_CLASSES, dtype=jnp.int32)[None, :]
        label = label.astype(jnp.bfloat16)       # exact 0/1, half the HBM bytes
    elif target.ndim == 2 and target.shape[-1] == NUM_CLASSES:
        label = target.astype(jnp.float32)       # soft labels
    else:
        raise ValueError("label shape not supported")

    granule = 8 * LANES
    # Free, contiguous view (N, 2) -> (2N,); classes interleave on lanes.
    x_flat = logits.reshape(-1)
    lab_flat = label.reshape(-1)
    padded = ((n_valid + granule - 1) // granule) * granule
    if padded != n_valid:
        # Only pads up to the next 1024 elements, and only when needed.
        x_flat = jnp.pad(x_flat, (0, padded - n_valid))
        lab_flat = jnp.pad(lab_flat, (0, padded - n_valid))
    m = padded // LANES                           # always a multiple of 8
    x2 = x_flat.reshape(m, LANES)
    lab2 = lab_flat.reshape(m, LANES)

    tile_rows = max(8, (int(tile_rows) // 8) * 8)
    tile_rows = min(tile_rows, m)
    num_blocks = (m + tile_rows - 1) // tile_rows
    tile_elems = tile_rows * LANES
    full_blocks = n_valid // tile_elems           # blocks with no invalid elems
    has_tail = num_blocks * tile_elems > n_valid

    kernel = functools.partial(
        _focal_loss_kernel, alpha=float(alpha), gamma=float(gamma),
        n_valid=int(n_valid), full_blocks=int(full_blocks),
        has_tail=bool(has_tail))

    partials = pl.pallas_call(
        kernel,
        out_shape=jax.ShapeDtypeStruct((num_blocks * 8, LANES), jnp.float32),
        grid=(num_blocks,),
        in_specs=[
            pl.BlockSpec((tile_rows, LANES), lambda i: (i, 0)),
            pl.BlockSpec((tile_rows, LANES), lambda i: (i, 0)),
        ],
        out_specs=pl.BlockSpec((8, LANES), lambda i: (i, 0)),
        compiler_params=pltpu.CompilerParams(
            dimension_semantics=("parallel",),
        ),
    )(x2, lab2)

    total = jnp.sum(partials)
    if reduction == "mean":
        return total / jnp.float32(n_valid)
    if reduction == "sum":
        return total
    # TODO(synk): reduction='none' (per-element loss output) is not wired up.
    raise NotImplementedError("reduction must be 'mean' or 'sum'")


def focal_loss_ref(logits, target, *, alpha=ALPHA, gamma=GAMMA, reduction="mean"):
    """Pure-JAX reference mirroring the PyTorch module."""
    logits = logits.astype(jnp.float32)
    probs = jax.nn.softmax(logits, axis=1)
    target = jnp.asarray(target)
    if target.ndim == 1 or (target.ndim == 2 and target.shape[-1] == 1):
        label = jax.nn.one_hot(target.reshape(-1).astype(jnp.int32),
                               NUM_CLASSES, dtype=jnp.float32)
    else:
        label = target.astype(jnp.float32)
    coeff = -jnp.power(jnp.abs(label - probs), gamma)
    log_probs = jax.nn.log_sigmoid(logits)
    log_1_probs = jax.nn.log_sigmoid(-logits)
    loss = label * alpha * log_probs + (1.0 - label) * (1.0 - alpha) * log_1_probs
    loss = loss * coeff
    if reduction == "mean":
        return loss.mean()
    if reduction == "sum":
        return loss.sum()
    return loss


if __name__ == "__main__":
    key = jax.random.PRNGKey(0)
    k1, k2, k3 = jax.random.split(key, 3)

    # Case 1: integer targets (one_hot branch), ragged N, mean reduction.
    N1 = 100
    logits1 = jax.random.normal(k1, (N1, NUM_CLASSES), dtype=jnp.float32)
    target1 = jax.random.randint(k2, (N1,), 0, NUM_CLASSES)
    out1 = jax.block_until_ready(focal_loss(logits1, target1, reduction="mean"))
    ref1 = focal_loss_ref(logits1, target1, reduction="mean")
    assert jnp.allclose(out1, ref1, atol=1e-5, rtol=1e-5), (out1, ref1)

    # Case 2: soft (N, 2) labels, sum reduction.
    N2 = 64
    logits2 = jax.random.normal(k3, (N2, NUM_CLASSES), dtype=jnp.float32)
    soft = jax.nn.softmax(jax.random.normal(k2, (N2, NUM_CLASSES)), axis=1)
    out2 = jax.block_until_ready(focal_loss(logits2, soft, reduction="sum"))
    ref2 = focal_loss_ref(logits2, soft, reduction="sum")
    assert jnp.allclose(out2, ref2, atol=1e-5, rtol=1e-5), (out2, ref2)

    print("KERNEL_OK")
</pallas_src>

<mosaic_0001>
module attributes {stable_mosaic.version = 11 : i64} {
  func.func @_focal_loss_kernel(%arg0: i32, %arg1: memref<8x128xf32, #tpu.memory_space<vmem>>, %arg2: memref<8x128xbf16, #tpu.memory_space<vmem>>, %arg3: memref<8x128xf32, #tpu.memory_space<vmem>>) attributes {dimension_semantics = [#tpu.dimension_semantics<parallel>], iteration_bounds = array<i64: 1>, scalar_prefetch = 0 : i64, scratch_operands = 0 : i64, tpu.core_type = #tpu.core_type<tc>, window_params = [{transform_indices = @transform_0, window_bounds = array<i64: 8, 128>}, {transform_indices = @transform_1, window_bounds = array<i64: 8, 128>}, {transform_indices = @transform_2, window_bounds = array<i64: 8, 128>}]} {
    %c0 = arith.constant 0 : index
    %c0_0 = arith.constant 0 : index
    %0 = vector.load %arg1[%c0, %c0_0] : memref<8x128xf32, #tpu.memory_space<vmem>>, vector<8x128xf32>
    %c0_1 = arith.constant 0 : index
    %c0_2 = arith.constant 0 : index
    %1 = vector.load %arg2[%c0_1, %c0_2] : memref<8x128xbf16, #tpu.memory_space<vmem>>, vector<8x128xbf16>
    %2 = arith.extf %1 : vector<8x128xbf16> to vector<8x128xf32>
    %3 = tpu.iota {dimensions = array<i32: 0>} : vector<128x128xi32>
    %4 = tpu.iota {dimensions = array<i32: 1>} : vector<128x128xi32>
    %c1_i32 = arith.constant 1 : i32
    %5 = vector.broadcast %c1_i32 : i32 to vector<128x128xi32>
    %6 = arith.xori %3, %5 : vector<128x128xi32>
    %7 = arith.cmpi eq, %6, %4 : vector<128x128xi32>
    %8 = arith.extui %7 : vector<128x128xi1> to vector<128x128xi32>
    %9 = arith.sitofp %8 : vector<128x128xi32> to vector<128x128xf32>
    %cst = arith.constant dense<0.000000e+00> : vector<8x128xf32>
    %10 = tpu.matmul %0, %9, %cst {dimension_numbers = #tpu.dot_dimension_numbers<[1], [0], [0], [1], [0, 0, 1, 1], [], []>} : vector<8x128xf32>, vector<128x128xf32>, vector<8x128xf32> -> vector<8x128xf32>
    %11 = arith.subf %0, %10 : vector<8x128xf32>
    %cst_3 = arith.constant 0.000000e+00 : f32
    %12 = vector.broadcast %cst_3 : f32 to vector<8x128xf32>
    %13 = arith.subf %12, %11 : vector<8x128xf32>
    %14 = math.exp %13 : vector<8x128xf32>
    %cst_4 = arith.constant 1.000000e+00 : f32
    %15 = vector.broadcast %cst_4 : f32 to vector<8x128xf32>
    %16 = arith.addf %15, %14 : vector<8x128xf32>
    %cst_5 = arith.constant 1.000000e+00 : f32
    %17 = vector.broadcast %cst_5 : f32 to vector<8x128xf32>
    %18 = arith.divf %17, %16 : vector<8x128xf32>
    %19 = arith.subf %2, %18 : vector<8x128xf32>
    %20 = math.absf %19 : vector<8x128xf32>
    %21 = arith.mulf %20, %20 : vector<8x128xf32>
    %cst_6 = arith.constant 0.000000e+00 : f32
    %22 = vector.broadcast %cst_6 : f32 to vector<8x128xf32>
    %23 = arith.subf %22, %21 : vector<8x128xf32>
    %24 = math.absf %0 : vector<8x128xf32>
    %cst_7 = arith.constant 0.000000e+00 : f32
    %25 = vector.broadcast %cst_7 : f32 to vector<8x128xf32>
    %26 = arith.subf %25, %24 : vector<8x128xf32>
    %27 = math.exp %26 : vector<8x128xf32>
    %28 = math.log1p %27 : vector<8x128xf32>
    %cst_8 = arith.constant 0.000000e+00 : f32
    %29 = vector.broadcast %cst_8 : f32 to vector<8x128xf32>
    %30 = arith.minimumf %0, %29 : vector<8x128xf32>
    %31 = arith.subf %30, %28 : vector<8x128xf32>
    %cst_9 = arith.constant 0.000000e+00 : f32
    %32 = vector.broadcast %cst_9 : f32 to vector<8x128xf32>
    %33 = arith.subf %32, %0 : vector<8x128xf32>
    %cst_10 = arith.constant 0.000000e+00 : f32
    %34 = vector.broadcast %cst_10 : f32 to vector<8x128xf32>
    %35 = arith.minimumf %33, %34 : vector<8x128xf32>
    %36 = arith.subf %35, %28 : vector<8x128xf32>
    %cst_11 = arith.constant 2.500000e-01 : f32
    %37 = vector.broadcast %cst_11 : f32 to vector<8x128xf32>
    %38 = arith.mulf %2, %37 : vector<8x128xf32>
    %39 = arith.mulf %38, %31 : vector<8x128xf32>
    %cst_12 = arith.constant 1.000000e+00 : f32
    %40 = vector.broadcast %cst_12 : f32 to vector<8x128xf32>
    %41 = arith.subf %40, %2 : vector<8x128xf32>
    %cst_13 = arith.constant 7.500000e-01 : f32
    %42 = vector.broadcast %cst_13 : f32 to vector<8x128xf32>
    %43 = arith.mulf %41, %42 : vector<8x128xf32>
    %44 = arith.mulf %43, %36 : vector<8x128xf32>
    %45 = arith.addf %39, %44 : vector<8x128xf32>
    %46 = arith.mulf %45, %23 : vector<8x128xf32>
    %c0_i32 = arith.constant 0 : i32
    %47 = arith.cmpi slt, %arg0, %c0_i32 : i32
    %48 = arith.extui %47 : i1 to i32
    %c0_i32_14 = arith.constant 0 : i32
    %49 = arith.cmpi ne, %48, %c0_i32_14 : i32
    scf.if %49 {
      %53 = vector.shape_cast %46 : vector<8x128xf32> to vector<1x8x128xf32>
      %cst_17 = arith.constant dense<0.000000e+00> : vector<8x128xf32>
      %54 = vector.multi_reduction <add>, %53, %cst_17 [0] : vector<1x8x128xf32> to vector<8x128xf32>
      %c0_18 = arith.constant 0 : index
      %c0_19 = arith.constant 0 : index
      %55 = vector.load %arg3[%c0_18, %c0_19] : memref<8x128xf32, #tpu.memory_space<vmem>>, vector<8x128xf32>
      tpu.vector_store %arg3[%c0_18, %c0_19], %54 {strides = array<i32>} : memref<8x128xf32, #tpu.memory_space<vmem>>, vector<8x128xf32>,
    } else {
    }
    %c0_i32_15 = arith.constant 0 : i32
    %50 = arith.cmpi sge, %arg0, %c0_i32_15 : i32
    %51 = arith.extui %50 : i1 to i32
    %c0_i32_16 = arith.constant 0 : i32
    %52 = arith.cmpi ne, %51, %c0_i32_16 : i32
    scf.if %52 {
      %53 = tpu.iota {dimensions = array<i32: 0>} : vector<8x128xi32>
      %54 = tpu.iota {dimensions = array<i32: 1>} : vector<8x128xi32>
      %c8_i32 = arith.constant 8 : i32
      %55 = arith.muli %arg0, %c8_i32 : i32
      %56 = vector.broadcast %55 : i32 to vector<8x128xi32>
      %57 = arith.addi %56, %53 : vector<8x128xi32>
      %c128_i32 = arith.constant 128 : i32
      %58 = vector.broadcast %c128_i32 : i32 to vector<8x128xi32>
      %59 = arith.muli %57, %58 : vector<8x128xi32>
      %60 = arith.addi %59, %54 : vector<8x128xi32>
      %c200_i32 = arith.constant 200 : i32
      %61 = vector.broadcast %c200_i32 : i32 to vector<8x128xi32>
      %62 = arith.cmpi slt, %60, %61 : vector<8x128xi32>
      %cst_17 = arith.constant 0.000000e+00 : f32
      %63 = vector.broadcast %cst_17 : f32 to vector<8x128xf32>
      %64 = arith.select %62, %46, %63 : vector<8x128xi1>, vector<8x128xf32>
      %65 = vector.shape_cast %64 : vector<8x128xf32> to vector<1x8x128xf32>
      %cst_18 = arith.constant dense<0.000000e+00> : vector<8x128xf32>
      %66 = vector.multi_reduction <add>, %65, %cst_18 [0] : vector<1x8x128xf32> to vector<8x128xf32>
      %c0_19 = arith.constant 0 : index
      %c0_20 = arith.constant 0 : index
      %67 = vector.load %arg3[%c0_19, %c0_20] : memref<8x128xf32, #tpu.memory_space<vmem>>, vector<8x128xf32>
      tpu.vector_store %arg3[%c0_19, %c0_20], %66 {strides = array<i32>} : memref<8x128xf32, #tpu.memory_space<vmem>>, vector<8x128xf32>,
    } else {
    }
    return
  }
  func.func @transform_0(%arg0: i32) -> (i32, i32) {
    %c0_i32 = arith.constant 0 : i32
    %c0_i32_0 = arith.constant 0 : i32
    return %arg0, %c0_i32 : i32, i32
  }
  func.func @transform_1(%arg0: i32) -> (i32, i32) {
    %c0_i32 = arith.constant 0 : i32
    %c0_i32_0 = arith.constant 0 : i32
    return %arg0, %c0_i32 : i32, i32
  }
  func.func @transform_2(%arg0: i32) -> (i32, i32) {
    %c0_i32 = arith.constant 0 : i32
    %c0_i32_0 = arith.constant 0 : i32
    return %arg0, %c0_i32 : i32, i32
  }
}

</mosaic_0001>

<llo_original>
// kernel: tpu_custom_call.1
$region0: #{tpu_custom_call.1}
  #allocation0 [shape = 'u32[]', space=smem, size = 0x4, offset = 0x4, fixed_abs, tag = 'smem constant byte address 0x4 - core index']
  #allocation1 [shape = 'u32[144,128]{1,0:T(1,128)}', space=vmem, size = 0x12000, scoped, tag = 'internal scratch']
  %s0 = inlined_call_operand.hbm [shape: f32[8,128], index: 0, kind: input, shape index: {}]
  %s1 = inlined_call_operand.hbm [shape: bf16[8,128], index: 1, kind: input, shape index: {}]
  %s2 = inlined_call_operand.hbm [shape: f32[8,128], index: 2, kind: output, shape index: {}]
  %s3 = sld [smem:[#allocation0]]
  $region34: #{tpu_custom_call.1} parent=0
    _
  %s5 = ssub.s32 1, %s3
  %s6 = scalar_select 0, %s5, %s3
  $region1: #{tpu_custom_call.1} parent=0
    #allocation2 [shape = 'u8[4096]{0}', space=vmem, size = 0x1000, scoped, tag = 'input window, operand 0, single buffered']
    #allocation3 [shape = 's32[1]{0}', space=sflag, size = 0x4, scoped, tag = 'scoped memory for tpu_custom_call.1']
    #allocation4 [shape = 's32[1]{0}', space=sflag, size = 0x4, scoped, tag = 'scoped memory for tpu_custom_call.1']
    #allocation5 [shape = 'u8[2048]{0}', space=vmem, size = 0x800, scoped, tag = 'input window, operand 1, single buffered']
    #allocation6 [shape = 's32[1]{0}', space=sflag, size = 0x4, scoped, tag = 'scoped memory for tpu_custom_call.1']
    #allocation7 [shape = 'u8[4096]{0}', space=vmem, size = 0x1000, scoped, tag = 'output window, operand 0, single buffered']
    %7 = vsyncpa [#allocation3], 0
    %8 = vsyncpa [#allocation6], 0
    %9 = vsyncpa [#allocation4], 0
    // Predicated region
    $region2: #{tpu_custom_call.1} parent=1 // pred_check
      _
    $region3: #{tpu_custom_call.1} parent=1 // pred_check_branch
      %11 = sbr.rel (0) target = $region5
    $region4: #{tpu_custom_call.1} parent=1 // pred_region
      %s13 = ssub.s32 128, 128
      %14 = vsyncadd [#allocation3], %s13
      %s16 = sshll.u32 [#allocation2], 4
      %s17 = int_to_ptr.vmem [resolvable:$true] %s16
      %19 = dma.hbm_to_vmem [thread:$0]  %s0, 128, %s17, [#allocation3]
    $region5: #{tpu_custom_call.1} parent=1 // pred_fallthru
      _
    // Predicated region
    $region6: #{tpu_custom_call.1} parent=1 // pred_check
      _
    $region7: #{tpu_custom_call.1} parent=1 // pred_check_branch
      %21 = sbr.rel (0) target = $region9
    $region8: #{tpu_custom_call.1} parent=1 // pred_region
      %s23 = ssub.s32 64, 64
      %24 = vsyncadd [#allocation6], %s23
      %s26 = sshll.u32 [#allocation5], 4
      %s27 = int_to_ptr.vmem [resolvable:$true] %s26
      %29 = dma.hbm_to_vmem [thread:$0]  %s1, 64, %s27, [#allocation6]
    $region9: #{tpu_custom_call.1} parent=1 // pred_fallthru
      _
    // Predicated region
    $region10: #{tpu_custom_call.1} parent=1 // pred_check
      _
    $region11: #{tpu_custom_call.1} parent=1 // pred_check_branch
      %31 = sbr.rel (0) target = $region13
    $region12: #{tpu_custom_call.1} parent=1 // pred_region
      %32 = dma.done [#allocation3], 128
    $region13: #{tpu_custom_call.1} parent=1 // pred_fallthru
      _
    // Predicated region
    $region14: #{tpu_custom_call.1} parent=1 // pred_check
      _
    $region15: #{tpu_custom_call.1} parent=1 // pred_check_branch
      %34 = sbr.rel (0) target = $region17
    $region16: #{tpu_custom_call.1} parent=1 // pred_region
      %35 = dma.done [#allocation6], 64
    $region17: #{tpu_custom_call.1} parent=1 // pred_fallthru
      _
    %v36 = vld [vmem:[#allocation2] sm:$0xff]
    %v37 = vld [vmem:[#allocation5] sm:$0xf]
    %v38 = vunpack.c.l.bf16 %v37
    %v39 = vlaneseq
    %v40 = vshrl.u32 %v39, 7
    %v41 = vadd.s32 %v40, 8
    %v42 = vadd.s32 %v40, 16
    %v43 = vadd.s32 %v40, 24
    %v44 = vadd.s32 %v40, 32
    %v45 = vadd.s32 %v40, 40
    %v46 = vadd.s32 %v40, 48
    %v47 = vadd.s32 %v40, 56
    %v48 = vadd.s32 %v40, 64
    %v49 = vadd.s32 %v40, 72
    %v50 = vadd.s32 %v40, 80
    %v51 = vadd.s32 %v40, 88
    %v52 = vadd.s32 %v40, 96
    %v53 = vadd.s32 %v40, 104
    %v54 = vadd.s32 %v40, 112
    %v55 = vadd.s32 %v40, 120
    %v56 = vlaneseq
    %v57 = vand.u32 %v56, 127
    %v58 = vxor.u32 %v40, 1
    %v59 = vxor.u32 %v41, 1
    %v60 = vxor.u32 %v42, 1
    %v61 = vxor.u32 %v43, 1
    %v62 = vxor.u32 %v44, 1
    %v63 = vxor.u32 %v45, 1
    %v64 = vxor.u32 %v46, 1
    %v65 = vxor.u32 %v47, 1
    %v66 = vxor.u32 %v48, 1
    %v67 = vxor.u32 %v49, 1
    %v68 = vxor.u32 %v50, 1
    %v69 = vxor.u32 %v51, 1
    %v70 = vxor.u32 %v52, 1
    %v71 = vxor.u32 %v53, 1
    %v72 = vxor.u32 %v54, 1
    %v73 = vxor.u32 %v55, 1
    %vm74 = vcmp.eq.s32.totalorder %v58, %v57
    %vm75 = vcmp.eq.s32.totalorder %v59, %v57
    %vm76 = vcmp.eq.s32.totalorder %v60, %v57
    %vm77 = vcmp.eq.s32.totalorder %v61, %v57
    %vm78 = vcmp.eq.s32.totalorder %v62, %v57
    %vm79 = vcmp.eq.s32.totalorder %v63, %v57
    %vm80 = vcmp.eq.s32.totalorder %v64, %v57
    %vm81 = vcmp.eq.s32.totalorder %v65, %v57
    %vm82 = vcmp.eq.s32.totalorder %v66, %v57
    %vm83 = vcmp.eq.s32.totalorder %v67, %v57
    %vm84 = vcmp.eq.s32.totalorder %v68, %v57
    %vm85 = vcmp.eq.s32.totalorder %v69, %v57
    %vm86 = vcmp.eq.s32.totalorder %v70, %v57
    %vm87 = vcmp.eq.s32.totalorder %v71, %v57
    %vm88 = vcmp.eq.s32.totalorder %v72, %v57
    %vm89 = vcmp.eq.s32.totalorder %v73, %v57
    %v90 = vsel %vm74, 1, 0
    %v91 = vsel %vm75, 1, 0
    %v92 = vsel %vm76, 1, 0
    %v93 = vsel %vm77, 1, 0
    %v94 = vsel %vm78, 1, 0
    %v95 = vsel %vm79, 1, 0
    %v96 = vsel %vm80, 1, 0
    %v97 = vsel %vm81, 1, 0
    %v98 = vsel %vm82, 1, 0
    %v99 = vsel %vm83, 1, 0
    %v100 = vsel %vm84, 1, 0
    %v101 = vsel %vm85, 1, 0
    %v102 = vsel %vm86, 1, 0
    %v103 = vsel %vm87, 1, 0
    %v104 = vsel %vm88, 1, 0
    %v105 = vsel %vm89, 1, 0
    %v106 = vcvt.s32.f32 %v90
    %v107 = vcvt.s32.f32 %v91
    %v108 = vcvt.s32.f32 %v92
    %v109 = vcvt.s32.f32 %v93
    %v110 = vcvt.s32.f32 %v94
    %v111 = vcvt.s32.f32 %v95
    %v112 = vcvt.s32.f32 %v96
    %v113 = vcvt.s32.f32 %v97
    %v114 = vcvt.s32.f32 %v98
    %v115 = vcvt.s32.f32 %v99
    %v116 = vcvt.s32.f32 %v100
    %v117 = vcvt.s32.f32 %v101
    %v118 = vcvt.s32.f32 %v102
    %v119 = vcvt.s32.f32 %v103
    %v120 = vcvt.s32.f32 %v104
    %v121 = vcvt.s32.f32 %v105
    %122 = vmatprep.subr.mxu0 0.0
    %123 = vmatpush1.msra.mxu0 %v106
    %124 = vmatprep.subr.mxu0 0.0
    %125 = vmatpush1.msra.mxu0 %v107
    %126 = vmatprep.subr.mxu0 0.0
    %127 = vmatpush1.msra.mxu0 %v108
    %128 = vmatprep.subr.mxu0 0.0
    %129 = vmatpush1.msra.mxu0 %v109
    %130 = vmatprep.subr.mxu0 0.0
    %131 = vmatpush1.msra.mxu0 %v110
    %132 = vmatprep.subr.mxu0 0.0
    %133 = vmatpush1.msra.mxu0 %v111
    %134 = vmatprep.subr.mxu0 0.0
    %135 = vmatpush1.msra.mxu0 %v112
    %136 = vmatprep.subr.mxu0 0.0
    %137 = vmatpush1.msra.mxu0 %v113
    %138 = vmatprep.subr.mxu0 0.0
    %139 = vmatpush1.msra.mxu0 %v114
    %140 = vmatprep.subr.mxu0 0.0
    %141 = vmatpush1.msra.mxu0 %v115
    %142 = vmatprep.subr.mxu0 0.0
    %143 = vmatpush1.msra.mxu0 %v116
    %144 = vmatprep.subr.mxu0 0.0
    %145 = vmatpush1.msra.mxu0 %v117
    %146 = vmatprep.subr.mxu0 0.0
    %147 = vmatpush1.msra.mxu0 %v118
    %148 = vmatprep.subr.mxu0 0.0
    %149 = vmatpush1.msra.mxu0 %v119
    %150 = vmatprep.subr.mxu0 0.0
    %151 = vmatpush1.msra.mxu0 %v120
    %152 = vmatprep.subr.mxu0 0.0
    %153 = vmatpush1.msra.mxu0 %v121
    %154 = vmatprep.subr.mxu0 0.0
    %155 = vmatpush1.msra.mxu0 0.0
    %156 = vmatprep.subr.mxu0 0.0
    %157 = vmatpush1.msra.mxu0 0.0
    %158 = vmatprep.subr.mxu0 0.0
    %159 = vmatpush1.msra.mxu0 0.0
    %160 = vmatprep.subr.mxu0 0.0
    %161 = vmatpush1.msra.mxu0 0.0
    %162 = vmatprep.subr.mxu0 0.0
    %163 = vmatpush1.msra.mxu0 0.0
    %164 = vmatprep.subr.mxu0 0.0
    %165 = vmatpush1.msra.mxu0 0.0
    %166 = vmatprep.subr.mxu0 0.0
    %167 = vmatpush1.msra.mxu0 0.0
    %168 = vmatprep.subr.mxu0 0.0
    %169 = vmatpush1.msra.mxu0 0.0
    %170 = vmatprep.subr.mxu0 0.0
    %171 = vmatpush1.msra.mxu0 0.0
    %172 = vmatprep.subr.mxu0 0.0
    %173 = vmatpush1.msra.mxu0 0.0
    %174 = vmatprep.subr.mxu0 0.0
    %175 = vmatpush1.msra.mxu0 0.0
    %176 = vmatprep.subr.mxu0 0.0
    %177 = vmatpush1.msra.mxu0 0.0
    %178 = vmatprep.subr.mxu0 0.0
    %179 = vmatpush1.msra.mxu0 0.0
    %180 = vmatprep.subr.mxu0 0.0
    %181 = vmatpush1.msra.mxu0 0.0
    %182 = vmatprep.subr.mxu0 0.0
    %183 = vmatpush1.msra.mxu0 0.0
    %184 = vmatprep.subr.mxu0 0.0
    %185 = vmatpush1.msra.mxu0 0.0
    %186 = vmatprep.mubr.f32.mxu0 0.0
    %187 = vmatmul.mubr.f32.gmra.mrb[0].mxu0 %v36
    %v188 = vpop.f32.mrb[0].mxu0
    %v189 = vadd.f32 0.0, %v188
    %v190 = vpop.f32.mrb[0].mxu0
    %191 = vdwg.mxu0
    %v192 = vsub.f32 %v36, %v189
    %v193 = vsub.f32 0.0, %v192
    %v194 = vmul.f32 %v193, 1.442695
    %v195 = vpow.pop %v194
    %v196 = vadd.f32 %v195, 1.0
    %v197 = vrcp.pop %v196
    %v198 = vmul.f32 1.0, %v197
    %v199 = vsub.f32 %v38, %v198
    %v200 = vand.u32 2147483647, %v199
    %v201 = vmul.f32 %v200, %v200
    %v202 = vsub.f32 0.0, %v201
    %v203 = vand.u32 2147483647, %v36
    %v204 = vsub.f32 0.0, %v203
    %v205 = vmul.f32 %v204, 1.442695
    %v206 = vpow.pop %v205
    %v207 = vadd.f32 %v206, 1.0
    %v208 = vlog2.pop %v207
    %v209 = vmul.f32 %v208, 0.6931472
    %v210 = vmul.f32 -0.5, %v206
    %v211 = vadd.f32 %v210, 1.0
    %v212 = vmul.f32 %v211, %v206
    %v213 = vand.u32 2147483647, %v206
    %vm214 = vcmp.lt.f32.partialorder %v213, 0.0004427343
    %v215 = vsel %vm214, %v212, %v209
    %v216 = vmin.f32 %v36, 0.0
    %v217 = vsub.f32 %v216, %v215
    %v218 = vsub.f32 0.0, %v36
    %v219 = vmin.f32 %v218, 0.0
    %v220 = vsub.f32 %v219, %v215
    %v221 = vmul.f32 %v38, 0.25
    %v222 = vmul.f32 %v221, %v217
    %v223 = vsub.f32 1.0, %v38
    %v224 = vmul.f32 %v223, 0.75
    %v225 = vmul.f32 %v224, %v220
    %v226 = vadd.f32 %v222, %v225
    %v227 = vmul.f32 %v226, %v202
    %p228 = scmp.lt.s32.totalorder 0, 0
    // Predicated region
    $region18: #{tpu_custom_call.1} parent=1 // pred_check
      %p229 = pneg %p228
    $region19: #{tpu_custom_call.1} parent=1 // pred_check_branch
      %231 = sbr.rel (%p229) target = $region21
    $region20: #{tpu_custom_call.1} parent=1 // pred_region
      %v232 = vadd.f32 %v227, 0.0
      %233 = vst [vmem:[#allocation7] sm:$0xff] %v232
    $region21: #{tpu_custom_call.1} parent=1 // pred_fallthru
      _
    %p234 = scmp.ge.s32.totalorder 0, 0
    // Predicated region
    $region22: #{tpu_custom_call.1} parent=1 // pred_check
      %p235 = pneg %p234
    $region23: #{tpu_custom_call.1} parent=1 // pred_check_branch
      %237 = sbr.rel (%p235) target = $region25
    $region24: #{tpu_custom_call.1} parent=1 // pred_region
      %s238 = smul.u32 0, 8
      %v239 = vstv %s238
      %v240 = vadd.s32 %v239, %v40
      %v241 = vmul.u32 %v240, 128
      %v242 = vadd.s32 %v241, %v57
      %vm243 = vcmp.lt.s32.totalorder %v242, 200
      %v244 = vsel %vm243, %v227, 0.0
      %v245 = vadd.f32 %v244, 0.0
      %246 = vst [vmem:[#allocation7] sm:$0xff] %v245
    $region25: #{tpu_custom_call.1} parent=1 // pred_fallthru
      _
    // Predicated region
    $region26: #{tpu_custom_call.1} parent=1 // pred_check
      _
    $region27: #{tpu_custom_call.1} parent=1 // pred_check_branch
      %248 = sbr.rel (0) target = $region29
    $region28: #{tpu_custom_call.1} parent=1 // pred_region
      %s250 = ssub.s32 128, 128
      %251 = vsyncadd [#allocation4], %s250
      %s253 = sshll.u32 [#allocation7], 4
      %s254 = int_to_ptr.vmem [resolvable:$true] %s253
      %256 = dma.vmem_to_hbm [thread:$0]  %s254, 128, %s2, [#allocation4]
    $region29: #{tpu_custom_call.1} parent=1 // pred_fallthru
      _
    // Predicated region
    $region30: #{tpu_custom_call.1} parent=1 // pred_check
      _
    $region31: #{tpu_custom_call.1} parent=1 // pred_check_branch
      %258 = sbr.rel (0) target = $region33
    $region32: #{tpu_custom_call.1} parent=1 // pred_region
      %259 = dma.done [#allocation4], 128
    $region33: #{tpu_custom_call.1} parent=1 // pred_fallthru
      _
    %260 = vsyncpa [#allocation3], 1
    %261 = vsyncpa [#allocation6], 1
    %262 = vsyncpa [#allocation4], 1

</llo_original>
